<compile_context>
chip_gen: v6e
topology: v6e:2x2x1
jax: 0.10.0
libtpu: 0.0.40
codegen_flags: <defaults>
</compile_context>

<pallas_src>
import functools
import math

import jax
import jax.numpy as jnp
from jax.experimental import pallas as pl
from jax.experimental.pallas import tpu as pltpu


def _round_up(n, m):
    return ((n + m - 1) // m) * m


def _project_and_attend(x_ref, wfgh_ref, bfgh_ref, bdiag_ref, *, dp,
                        inv_features_sqrt):
    """Fused f/g/h projection + per-head 'attention' for one batch tile.

    Returns attn * h as float32 of shape (tm, Dp)."""
    x = x_ref[...]                                                  # (tm, Dp)

    # One wide MXU matmul for [f | g | h] with f32 accumulation.
    fgh_cat = (jnp.dot(x, wfgh_ref[...], preferred_element_type=jnp.float32)
               + bfgh_ref[...])                                     # (tm, 3*Dp)
    f = fgh_cat[:, :dp]              # 128-aligned static slices: free
    g = fgh_cat[:, dp:2 * dp]
    h = fgh_cat[:, 2 * dp:]

    # Per-head inner product, broadcast back over each head's lanes, via one
    # (Dp x Dp) block-diagonal head-membership matmul (precomputed in the
    # wrapper, resident in VMEM).  Padded lanes have distinct head ids and
    # zero f/g/h, so they stay zero and never touch real heads.
    gf = (g * f).astype(bdiag_ref.dtype)
    fg = jnp.dot(gf, bdiag_ref[...],
                 preferred_element_type=jnp.float32) * inv_features_sqrt

    # softmax over a size-1 axis is identically 1; exp(fg - fg) keeps the
    # NaN/Inf propagation of torch.softmax.
    attn = jnp.exp(fg - fg)                                         # (tm, Dp)
    return attn * h


def _mha_kernel_fused(x_ref, wfgh_ref, bfgh_ref, bdiag_ref, wo_ref, bo_ref,
                      o_ref, *, dp, inv_features_sqrt):
    """1-D grid over batch tiles; output projection fully resident
    (no j axis, no scratch round-trip)."""
    fgh = _project_and_attend(x_ref, wfgh_ref, bfgh_ref, bdiag_ref,
                              dp=dp, inv_features_sqrt=inv_features_sqrt)
    o_ref[...] = (jnp.dot(fgh.astype(wo_ref.dtype), wo_ref[...],
                          preferred_element_type=jnp.float32)
                  + bo_ref[...]).astype(o_ref.dtype)


def _mha_kernel_split(x_ref, wfgh_ref, bfgh_ref, bdiag_ref, wo_ref, bo_ref,
                      o_ref, fgh_ref, *, dp, inv_features_sqrt):
    """2-D grid (batch tiles i, output-column tiles j) for large output dims.

    j == 0 computes the projection/attention for this batch tile and stashes
    it in VMEM scratch; every j does one lane-dense (tm,Dp)@(Dp,tn) tile.
    NOTE: relies on j == 0 running before j > 0 within each batch tile, so the
    j axis must stay "arbitrary" (never parallel/core_parallel) and must
    remain the innermost grid axis."""
    j = pl.program_id(1)

    @pl.when(j == 0)
    def _():
        fgh = _project_and_attend(x_ref, wfgh_ref, bfgh_ref, bdiag_ref,
                                  dp=dp, inv_features_sqrt=inv_features_sqrt)
        fgh_ref[...] = fgh.astype(fgh_ref.dtype)

    o_ref[...] = (jnp.dot(fgh_ref[...], wo_ref[...],
                          preferred_element_type=jnp.float32)
                  + bo_ref[...]).astype(o_ref.dtype)


def multi_head_attention(x, params, heads, *, compute_dtype=jnp.bfloat16):
    """Forward pass of hypergan MultiHeadAttention as a Pallas TPU kernel.

    compute_dtype is the MXU operand dtype (bf16 by default for v6e/v7x
    throughput); accumulation is always f32 and the output is in x.dtype."""
    B, D = x.shape
    F = D // heads
    Dout = params["wo"].shape[1]
    out_dtype = x.dtype

    f32 = jnp.float32
    csize = jnp.dtype(compute_dtype).itemsize
    osize = jnp.dtype(out_dtype).itemsize

    dp = _round_up(D, 128)           # lane-dense feature dim
    dop = _round_up(Dout, 128)       # lane-dense output dim

    # Batch tile: as large as possible (MXU M-utilization, fewer grid steps),
    # clamped for small batches; multiple of 16 for packed sub-32-bit layouts.
    granule = 8 if (csize == 4 and osize == 4) else 16
    bp0 = _round_up(B, granule)
    tm = min(256, bp0)
    # v7x megacore: prefer >= 2 batch tiles so the "parallel" axis can shard
    # across both TensorCores when the batch is big enough to split.
    if bp0 // tm < 2 and bp0 >= 2 * granule:
        tm = _round_up(bp0 // 2, granule)
    bp = _round_up(B, tm)

    def pad2(a, rows, cols, dtype):
        a = jnp.asarray(a, f32)
        a = jnp.pad(a, ((0, rows - a.shape[0]), (0, cols - a.shape[1])))
        return a.astype(dtype)

    # Fused, pre-transposed projection weights [Wf | Wg | Wh] -> (Dp, 3*Dp).
    wfgh = jnp.concatenate([pad2(params["wf"], dp, dp, compute_dtype),
                            pad2(params["wg"], dp, dp, compute_dtype),
                            pad2(params["wh"], dp, dp, compute_dtype)], axis=1)
    bfgh = jnp.concatenate([pad2(params["bf"], 1, dp, f32),
                            pad2(params["bg"], 1, dp, f32),
                            pad2(params["bh"], 1, dp, f32)], axis=1)
    wo = pad2(params["wo"], dp, dop, compute_dtype)
    bo = pad2(params["bo"], 1, dop, f32)
    xp = pad2(x, bp, dp, compute_dtype)

    # Block-diagonal head-membership matrix, built once in the wrapper (no
    # per-tile iota/compare VALU work in the kernel).  Padded lanes get head
    # ids >= heads, so they never mix with real heads.
    head_id = jnp.arange(dp, dtype=jnp.int32) // F
    bdiag = (head_id[:, None] == head_id[None, :]).astype(compute_dtype)

    inv_f = 1.0 / math.sqrt(F)

    # VMEM budgeting: resident weights + double-buffered x / out tiles.
    resident_bytes = ((wfgh.size + bdiag.size + wo.size) * csize
                      + (bfgh.size + bo.size) * 4)
    tile_bytes = 2 * (tm * dp * csize + tm * dop * osize)
    fused = (resident_bytes + tile_bytes) <= (40 << 20)
    vmem_limit = int(min(max(resident_bytes + tile_bytes + (8 << 20), 32 << 20),
                         100 << 20))
    # TODO(synk): for very large input_size (3*Dp*Dp fused weight ~ VMEM), add
    # a K-tiled inner pipeline for the projection instead of keeping the whole
    # fused weight resident (matters first on v7x's 64 MiB VMEM).

    def _run(single_buffer_resident):
        # Constant-index (resident) inputs don't benefit from double
        # buffering; single-buffer them to halve their VMEM footprint.
        res_kw = (dict(pipeline_mode=pl.Buffered(1))
                  if single_buffer_resident else {})

        if fused:
            kernel = functools.partial(_mha_kernel_fused, dp=dp,
                                       inv_features_sqrt=inv_f)
            grid = (bp // tm,)
            in_specs = [
                pl.BlockSpec((tm, dp), lambda i: (i, 0)),             # x tile
                pl.BlockSpec((dp, 3 * dp), lambda i: (0, 0), **res_kw),
                pl.BlockSpec((1, 3 * dp), lambda i: (0, 0), **res_kw),
                pl.BlockSpec((dp, dp), lambda i: (0, 0), **res_kw),   # bdiag
                pl.BlockSpec((dp, dop), lambda i: (0, 0), **res_kw),  # Wo
                pl.BlockSpec((1, dop), lambda i: (0, 0), **res_kw),   # bo
            ]
            out_specs = pl.BlockSpec((tm, dop), lambda i: (i, 0))
            scratch = []
            dims = ("parallel",)
        else:
            tn = 512 if dop % 512 == 0 else (256 if dop % 256 == 0 else 128)
            kernel = functools.partial(_mha_kernel_split, dp=dp,
                                       inv_features_sqrt=inv_f)
            grid = (bp // tm, dop // tn)
            in_specs = [
                pl.BlockSpec((tm, dp), lambda i, j: (i, 0)),
                pl.BlockSpec((dp, 3 * dp), lambda i, j: (0, 0), **res_kw),
                pl.BlockSpec((1, 3 * dp), lambda i, j: (0, 0), **res_kw),
                pl.BlockSpec((dp, dp), lambda i, j: (0, 0), **res_kw),
                pl.BlockSpec((dp, tn), lambda i, j: (0, j)),          # Wo col
                pl.BlockSpec((1, tn), lambda i, j: (0, j)),
            ]
            out_specs = pl.BlockSpec((tm, tn), lambda i, j: (i, j))
            scratch = [pltpu.VMEM((tm, dp), compute_dtype)]
            dims = ("parallel", "arbitrary")

        return pl.pallas_call(
            kernel,
            out_shape=jax.ShapeDtypeStruct((bp, dop), out_dtype),
            grid_spec=pltpu.PrefetchScalarGridSpec(
                num_scalar_prefetch=0,
                grid=grid,
                in_specs=in_specs,
                out_specs=out_specs,
                scratch_shapes=scratch),
            compiler_params=pltpu.CompilerParams(
                dimension_semantics=dims,
                vmem_limit_bytes=vmem_limit),
        )(xp, wfgh, bfgh, bdiag, wo, bo)

    try:
        out = _run(True)
    except Exception:
        # pipeline_mode=pl.Buffered(1) may be unsupported on some jax builds;
        # fall back to default (double-buffered) resident inputs.
        out = _run(False)

    return out[:B, :Dout]


def init_params(key, input_size, output_size):
    """Deterministic init mimicking nn.Linear's default (uniform +/- 1/sqrt(fan_in)).

    Weights stored PRE-TRANSPOSED as (in_features, out_features) so the kernel
    computes y = x @ W + b (== PyTorch's x @ W_pt.T + b)."""
    ks = jax.random.split(key, 8)

    def linear(kw, kb, fan_in, fan_out):
        bound = 1.0 / math.sqrt(fan_in)
        w = jax.random.uniform(kw, (fan_in, fan_out), jnp.float32, -bound, bound)
        b = jax.random.uniform(kb, (1, fan_out), jnp.float32, -bound, bound)
        return w, b

    wf, bf = linear(ks[0], ks[1], input_size, input_size)
    wg, bg = linear(ks[2], ks[3], input_size, input_size)
    wh, bh = linear(ks[4], ks[5], input_size, input_size)
    wo, bo = linear(ks[6], ks[7], input_size, output_size)
    return dict(wf=wf, bf=bf, wg=wg, bg=bg, wh=wh, bh=bh, wo=wo, bo=bo)


def reference(x, params, heads):
    """Pure-JAX mirror of the PyTorch forward (for correctness checking)."""
    B, D = x.shape
    F = D // heads
    f = (x @ params["wf"] + params["bf"]).reshape(B, 1, heads, F).transpose(0, 2, 3, 1)
    g = (x @ params["wg"] + params["bg"]).reshape(B, 1, heads, F).transpose(0, 2, 1, 3)
    fg = jnp.matmul(g, f) / math.sqrt(F)
    attn = jax.nn.softmax(fg, axis=-1)
    h = (x @ params["wh"] + params["bh"]).reshape(B, 1, heads, F).transpose(0, 2, 1, 3)
    fgh = jnp.matmul(attn, h)
    out = fgh.transpose(0, 2, 1, 3).reshape(x.shape)
    return out @ params["wo"] + params["bo"]


if __name__ == "__main__":
    batch = 2
    input_size = 32
    output_size = 32
    heads = 4

    key = jax.random.PRNGKey(0)
    kx, kp = jax.random.split(key)
    x = jax.random.normal(kx, (batch, input_size), jnp.float32)
    params = init_params(kp, input_size, output_size)

    ref = jax.block_until_ready(reference(x, params, heads))

    # Default path: bf16 MXU operands, f32 accumulation (loose tolerance).
    out_bf16 = jax.block_until_ready(multi_head_attention(x, params, heads))
    assert out_bf16.shape == (batch, output_size)
    assert out_bf16.dtype == x.dtype
    assert jnp.allclose(out_bf16, ref, atol=5e-2, rtol=5e-2), "bf16 path mismatch"

    # f32-operand path for a tight numerical check.
    out_f32 = jax.block_until_ready(
        multi_head_attention(x, params, heads, compute_dtype=jnp.float32))
    assert jnp.allclose(out_f32, ref, atol=1e-4, rtol=1e-4), "f32 path mismatch"

    print("KERNEL_OK")
</pallas_src>

<mosaic_0001>
module attributes {stable_mosaic.version = 11 : i64} {
  func.func @_mha_kernel_fused(%arg0: i32, %arg1: memref<16x128xbf16, #tpu.memory_space<vmem>>, %arg2: memref<128x384xbf16, #tpu.memory_space<vmem>>, %arg3: memref<1x384xf32, #tpu.memory_space<vmem>>, %arg4: memref<128x128xbf16, #tpu.memory_space<vmem>>, %arg5: memref<128x128xbf16, #tpu.memory_space<vmem>>, %arg6: memref<1x128xf32, #tpu.memory_space<vmem>>, %arg7: memref<16x128xf32, #tpu.memory_space<vmem>>) attributes {dimension_semantics = [#tpu.dimension_semantics<parallel>], iteration_bounds = array<i64: 1>, scalar_prefetch = 0 : i64, scratch_operands = 0 : i64, tpu.core_type = #tpu.core_type<tc>, window_params = [{transform_indices = @transform_0, window_bounds = array<i64: 16, 128>}, {pipeline_mode = #tpu.pipeline_mode<synchronous>, transform_indices = @transform_1, window_bounds = array<i64: 128, 384>}, {pipeline_mode = #tpu.pipeline_mode<synchronous>, transform_indices = @transform_2, window_bounds = array<i64: 1, 384>}, {pipeline_mode = #tpu.pipeline_mode<synchronous>, transform_indices = @transform_3, window_bounds = array<i64: 128, 128>}, {pipeline_mode = #tpu.pipeline_mode<synchronous>, transform_indices = @transform_4, window_bounds = array<i64: 128, 128>}, {pipeline_mode = #tpu.pipeline_mode<synchronous>, transform_indices = @transform_5, window_bounds = array<i64: 1, 128>}, {transform_indices = @transform_6, window_bounds = array<i64: 16, 128>}]} {
    %c0 = arith.constant 0 : index
    %c0_0 = arith.constant 0 : index
    %0 = vector.load %arg1[%c0, %c0_0] : memref<16x128xbf16, #tpu.memory_space<vmem>>, vector<16x128xbf16>
    %c0_1 = arith.constant 0 : index
    %c0_2 = arith.constant 0 : index
    %1 = vector.load %arg2[%c0_1, %c0_2] : memref<128x384xbf16, #tpu.memory_space<vmem>>, vector<128x384xbf16>
    %cst = arith.constant dense<0.000000e+00> : vector<16x384xf32>
    %2 = tpu.matmul %0, %1, %cst {dimension_numbers = #tpu.dot_dimension_numbers<[1], [0], [0], [1], [0, 0, 1, 1], [], []>} : vector<16x128xbf16>, vector<128x384xbf16>, vector<16x384xf32> -> vector<16x384xf32>
    %c0_3 = arith.constant 0 : index
    %c0_4 = arith.constant 0 : index
    %3 = vector.load %arg3[%c0_3, %c0_4] : memref<1x384xf32, #tpu.memory_space<vmem>>, vector<1x384xf32>
    %4 = vector.broadcast %3 : vector<1x384xf32> to vector<16x384xf32>
    %5 = arith.addf %2, %4 : vector<16x384xf32>
    %6 = vector.extract_strided_slice %5 {offsets = [0, 0], sizes = [16, 128], strides = [1, 1]} : vector<16x384xf32> to vector<16x128xf32>
    %7 = vector.extract_strided_slice %5 {offsets = [0, 128], sizes = [16, 128], strides = [1, 1]} : vector<16x384xf32> to vector<16x128xf32>
    %8 = vector.extract_strided_slice %5 {offsets = [0, 256], sizes = [16, 128], strides = [1, 1]} : vector<16x384xf32> to vector<16x128xf32>
    %9 = arith.mulf %7, %6 : vector<16x128xf32>
    %10 = arith.truncf %9 : vector<16x128xf32> to vector<16x128xbf16>
    %c0_5 = arith.constant 0 : index
    %c0_6 = arith.constant 0 : index
    %11 = vector.load %arg4[%c0_5, %c0_6] : memref<128x128xbf16, #tpu.memory_space<vmem>>, vector<128x128xbf16>
    %cst_7 = arith.constant dense<0.000000e+00> : vector<16x128xf32>
    %12 = tpu.matmul %10, %11, %cst_7 {dimension_numbers = #tpu.dot_dimension_numbers<[1], [0], [0], [1], [0, 0, 1, 1], [], []>} : vector<16x128xbf16>, vector<128x128xbf16>, vector<16x128xf32> -> vector<16x128xf32>
    %cst_8 = arith.constant 0.353553385 : f32
    %13 = vector.broadcast %cst_8 : f32 to vector<16x128xf32>
    %14 = arith.mulf %12, %13 : vector<16x128xf32>
    %15 = arith.subf %14, %14 : vector<16x128xf32>
    %16 = math.exp %15 : vector<16x128xf32>
    %17 = arith.mulf %16, %8 : vector<16x128xf32>
    %18 = arith.truncf %17 : vector<16x128xf32> to vector<16x128xbf16>
    %c0_9 = arith.constant 0 : index
    %c0_10 = arith.constant 0 : index
    %19 = vector.load %arg5[%c0_9, %c0_10] : memref<128x128xbf16, #tpu.memory_space<vmem>>, vector<128x128xbf16>
    %cst_11 = arith.constant dense<0.000000e+00> : vector<16x128xf32>
    %20 = tpu.matmul %18, %19, %cst_11 {dimension_numbers = #tpu.dot_dimension_numbers<[1], [0], [0], [1], [0, 0, 1, 1], [], []>} : vector<16x128xbf16>, vector<128x128xbf16>, vector<16x128xf32> -> vector<16x128xf32>
    %c0_12 = arith.constant 0 : index
    %c0_13 = arith.constant 0 : index
    %21 = vector.load %arg6[%c0_12, %c0_13] : memref<1x128xf32, #tpu.memory_space<vmem>>, vector<1x128xf32>
    %22 = vector.broadcast %21 : vector<1x128xf32> to vector<16x128xf32>
    %23 = arith.addf %20, %22 : vector<16x128xf32>
    %c0_14 = arith.constant 0 : index
    %c0_15 = arith.constant 0 : index
    %24 = vector.load %arg7[%c0_14, %c0_15] : memref<16x128xf32, #tpu.memory_space<vmem>>, vector<16x128xf32>
    tpu.vector_store %arg7[%c0_14, %c0_15], %23 {strides = array<i32>} : memref<16x128xf32, #tpu.memory_space<vmem>>, vector<16x128xf32>,
    return
  }
  func.func @transform_0(%arg0: i32) -> (i32, i32) {
    %c0_i32 = arith.constant 0 : i32
    %c0_i32_0 = arith.constant 0 : i32
    return %arg0, %c0_i32 : i32, i32
  }
  func.func @transform_1(%arg0: i32) -> (i32, i32) {
    %c0_i32 = arith.constant 0 : i32
    %c0_i32_0 = arith.constant 0 : i32
    %c0_i32_1 = arith.constant 0 : i32
    return %c0_i32, %c0_i32_0 : i32, i32
  }
  func.func @transform_2(%arg0: i32) -> (i32, i32) {
    %c0_i32 = arith.constant 0 : i32
    %c0_i32_0 = arith.constant 0 : i32
    %c0_i32_1 = arith.constant 0 : i32
    return %c0_i32, %c0_i32_0 : i32, i32
  }
  func.func @transform_3(%arg0: i32) -> (i32, i32) {
    %c0_i32 = arith.constant 0 : i32
    %c0_i32_0 = arith.constant 0 : i32
    %c0_i32_1 = arith.constant 0 : i32
    return %c0_i32, %c0_i32_0 : i32, i32
  }
  func.func @transform_4(%arg0: i32) -> (i32, i32) {
    %c0_i32 = arith.constant 0 : i32
    %c0_i32_0 = arith.constant 0 : i32
    %c0_i32_1 = arith.constant 0 : i32
    return %c0_i32, %c0_i32_0 : i32, i32
  }
  func.func @transform_5(%arg0: i32) -> (i32, i32) {
    %c0_i32 = arith.constant 0 : i32
    %c0_i32_0 = arith.constant 0 : i32
    %c0_i32_1 = arith.constant 0 : i32
    return %c0_i32, %c0_i32_0 : i32, i32
  }
  func.func @transform_6(%arg0: i32) -> (i32, i32) {
    %c0_i32 = arith.constant 0 : i32
    %c0_i32_0 = arith.constant 0 : i32
    return %arg0, %c0_i32 : i32, i32
  }
}

module attributes {stable_mosaic.version = 11 : i64} {
  func.func @_mha_kernel_fused(%arg0: i32, %arg1: memref<16x128xbf16, #tpu.memory_space<vmem>>, %arg2: memref<128x384xbf16, #tpu.memory_space<vmem>>, %arg3: memref<1x384xf32, #tpu.memory_space<vmem>>, %arg4: memref<128x128xbf16, #tpu.memory_space<vmem>>, %arg5: memref<128x128xbf16, #tpu.memory_space<vmem>>, %arg6: memref<1x128xf32, #tpu.memory_space<vmem>>, %arg7: memref<16x128xf32, #tpu.memory_space<vmem>>) attributes {dimension_semantics = [#tpu.dimension_semantics<parallel>], iteration_bounds = array<i64: 1>, scalar_prefetch = 0 : i64, scratch_operands = 0 : i64, tpu.core_type = #tpu.core_type<tc>, window_params = [{transform_indices = @transform_0, window_bounds = array<i64: 16, 128>}, {pipeline_mode = #tpu.pipeline_mode<synchronous>, transform_indices = @transform_1, window_bounds = array<i64: 128, 384>}, {pipeline_mode = #tpu.pipeline_mode<synchronous>, transform_indices = @transform_2, window_bounds = array<i64: 1, 384>}, {pipeline_mode = #tpu.pipeline_mode<synchronous>, transform_indices = @transform_3, window_bounds = array<i64: 128, 128>}, {pipeline_mode = #tpu.pipeline_mode<synchronous>, transform_indices = @transform_4, window_bounds = array<i64: 128, 128>}, {pipeline_mode = #tpu.pipeline_mode<synchronous>, transform_indices = @transform_5, window_bounds = array<i64: 1, 128>}, {transform_indices = @transform_6, window_bounds = array<i64: 16, 128>}]} {
    %c0 = arith.constant 0 : index
    %c0_0 = arith.constant 0 : index
    %0 = vector.load %arg1[%c0, %c0_0] : memref<16x128xbf16, #tpu.memory_space<vmem>>, vector<16x128xbf16>
    %c0_1 = arith.constant 0 : index
    %c0_2 = arith.constant 0 : index
    %1 = vector.load %arg2[%c0_1, %c0_2] : memref<128x384xbf16, #tpu.memory_space<vmem>>, vector<128x384xbf16>
    %cst = arith.constant dense<0.000000e+00> : vector<16x384xf32>
    %2 = tpu.matmul %0, %1, %cst {dimension_numbers = #tpu.dot_dimension_numbers<[1], [0], [0], [1], [0, 0, 1, 1], [], []>} : vector<16x128xbf16>, vector<128x384xbf16>, vector<16x384xf32> -> vector<16x384xf32>
    %c0_3 = arith.constant 0 : index
    %c0_4 = arith.constant 0 : index
    %3 = vector.load %arg3[%c0_3, %c0_4] : memref<1x384xf32, #tpu.memory_space<vmem>>, vector<1x384xf32>
    %4 = vector.broadcast %3 : vector<1x384xf32> to vector<16x384xf32>
    %5 = arith.addf %2, %4 : vector<16x384xf32>
    %6 = vector.extract_strided_slice %5 {offsets = [0, 0], sizes = [16, 128], strides = [1, 1]} : vector<16x384xf32> to vector<16x128xf32>
    %7 = vector.extract_strided_slice %5 {offsets = [0, 128], sizes = [16, 128], strides = [1, 1]} : vector<16x384xf32> to vector<16x128xf32>
    %8 = vector.extract_strided_slice %5 {offsets = [0, 256], sizes = [16, 128], strides = [1, 1]} : vector<16x384xf32> to vector<16x128xf32>
    %9 = arith.mulf %7, %6 : vector<16x128xf32>
    %10 = arith.truncf %9 : vector<16x128xf32> to vector<16x128xbf16>
    %c0_5 = arith.constant 0 : index
    %c0_6 = arith.constant 0 : index
    %11 = vector.load %arg4[%c0_5, %c0_6] : memref<128x128xbf16, #tpu.memory_space<vmem>>, vector<128x128xbf16>
    %cst_7 = arith.constant dense<0.000000e+00> : vector<16x128xf32>
    %12 = tpu.matmul %10, %11, %cst_7 {dimension_numbers = #tpu.dot_dimension_numbers<[1], [0], [0], [1], [0, 0, 1, 1], [], []>} : vector<16x128xbf16>, vector<128x128xbf16>, vector<16x128xf32> -> vector<16x128xf32>
    %cst_8 = arith.constant 0.353553385 : f32
    %13 = vector.broadcast %cst_8 : f32 to vector<16x128xf32>
    %14 = arith.mulf %12, %13 : vector<16x128xf32>
    %15 = arith.subf %14, %14 : vector<16x128xf32>
    %16 = math.exp %15 : vector<16x128xf32>
    %17 = arith.mulf %16, %8 : vector<16x128xf32>
    %18 = arith.truncf %17 : vector<16x128xf32> to vector<16x128xbf16>
    %c0_9 = arith.constant 0 : index
    %c0_10 = arith.constant 0 : index
    %19 = vector.load %arg5[%c0_9, %c0_10] : memref<128x128xbf16, #tpu.memory_space<vmem>>, vector<128x128xbf16>
    %cst_11 = arith.constant dense<0.000000e+00> : vector<16x128xf32>
    %20 = tpu.matmul %18, %19, %cst_11 {dimension_numbers = #tpu.dot_dimension_numbers<[1], [0], [0], [1], [0, 0, 1, 1], [], []>} : vector<16x128xbf16>, vector<128x128xbf16>, vector<16x128xf32> -> vector<16x128xf32>
    %c0_12 = arith.constant 0 : index
    %c0_13 = arith.constant 0 : index
    %21 = vector.load %arg6[%c0_12, %c0_13] : memref<1x128xf32, #tpu.memory_space<vmem>>, vector<1x128xf32>
    %22 = vector.broadcast %21 : vector<1x128xf32> to vector<16x128xf32>
    %23 = arith.addf %20, %22 : vector<16x128xf32>
    %c0_14 = arith.constant 0 : index
    %c0_15 = arith.constant 0 : index
    %24 = vector.load %arg7[%c0_14, %c0_15] : memref<16x128xf32, #tpu.memory_space<vmem>>, vector<16x128xf32>
    tpu.vector_store %arg7[%c0_14, %c0_15], %23 {strides = array<i32>} : memref<16x128xf32, #tpu.memory_space<vmem>>, vector<16x128xf32>,
    return
  }
  func.func @transform_0(%arg0: i32) -> (i32, i32) {
    %c0_i32 = arith.constant 0 : i32
    %c0_i32_0 = arith.constant 0 : i32
    return %arg0, %c0_i32 : i32, i32
  }
  func.func @transform_1(%arg0: i32) -> (i32, i32) {
    %c0_i32 = arith.constant 0 : i32
    %c0_i32_0 = arith.constant 0 : i32
    %c0_i32_1 = arith.constant 0 : i32
    return %c0_i32, %c0_i32_0 : i32, i32
  }
  func.func @transform_2(%arg0: i32) -> (i32, i32) {
    %c0_i32 = arith.constant 0 : i32
    %c0_i32_0 = arith.constant 0 : i32
    %c0_i32_1 = arith.constant 0 : i32
    return %c0_i32, %c0_i32_0 : i32, i32
  }
  func.func @transform_3(%arg0: i32) -> (i32, i32) {
    %c0_i32 = arith.constant 0 : i32
    %c0_i32_0 = arith.constant 0 : i32
    %c0_i32_1 = arith.constant 0 : i32
    return %c0_i32, %c0_i32_0 : i32, i32
  }
  func.func @transform_4(%arg0: i32) -> (i32, i32) {
    %c0_i32 = arith.constant 0 : i32
    %c0_i32_0 = arith.constant 0 : i32
    %c0_i32_1 = arith.constant 0 : i32
    return %c0_i32, %c0_i32_0 : i32, i32
  }
  func.func @transform_5(%arg0: i32) -> (i32, i32) {
    %c0_i32 = arith.constant 0 : i32
    %c0_i32_0 = arith.constant 0 : i32
    %c0_i32_1 = arith.constant 0 : i32
    return %c0_i32, %c0_i32_0 : i32, i32
  }
  func.func @transform_6(%arg0: i32) -> (i32, i32) {
    %c0_i32 = arith.constant 0 : i32
    %c0_i32_0 = arith.constant 0 : i32
    return %arg0, %c0_i32 : i32, i32
  }
}

</mosaic_0001>

<llo_original>
// kernel: tpu_custom_call.1
$region0: #{tpu_custom_call.1}
  #allocation0 [shape = 'u32[]', space=smem, size = 0x4, offset = 0x4, fixed_abs, tag = 'smem constant byte address 0x4 - core index']
  #allocation1 [shape = 'u32[144,128]{1,0:T(1,128)}', space=vmem, size = 0x12000, scoped, tag = 'internal scratch']
  %s0 = inlined_call_operand.hbm [shape: bf16[16,128], index: 0, kind: input, shape index: {}]
  %s1 = inlined_call_operand.hbm [shape: bf16[128,384], index: 1, kind: input, shape index: {}]
  %s2 = inlined_call_operand.vmem [shape: f32[1,384], index: 2, kind: input, shape index: {}]
  %s3 = inlined_call_operand.hbm [shape: bf16[128,128], index: 3, kind: input, shape index: {}]
  %s4 = inlined_call_operand.hbm [shape: bf16[128,128], index: 4, kind: input, shape index: {}]
  %s5 = inlined_call_operand.vmem [shape: f32[1,128], index: 5, kind: input, shape index: {}]
  %s6 = inlined_call_operand.hbm [shape: f32[16,128], index: 6, kind: output, shape index: {}]
  %s7 = sld [smem:[#allocation0]]
  $region50: #{tpu_custom_call.1} parent=0
    _
  %s9 = ssub.s32 1, %s7
  %s10 = scalar_select 0, %s9, %s7
  $region1: #{tpu_custom_call.1} parent=0
    #allocation2 [shape = 'u8[4096]{0}', space=vmem, size = 0x1000, scoped, tag = 'input window, operand 0, single buffered']
    #allocation3 [shape = 's32[1]{0}', space=sflag, size = 0x4, scoped, tag = 'scoped memory for tpu_custom_call.1']
    #allocation4 [shape = 's32[1]{0}', space=sflag, size = 0x4, scoped, tag = 'scoped memory for tpu_custom_call.1']
    #allocation5 [shape = 'u8[98304]{0}', space=vmem, size = 0x18000, scoped, tag = 'input window, operand 1, single buffered']
    #allocation6 [shape = 's32[1]{0}', space=sflag, size = 0x4, scoped, tag = 'scoped memory for tpu_custom_call.1']
    #allocation7 [shape = 'u8[32768]{0}', space=vmem, size = 0x8000, scoped, tag = 'input window, operand 3, single buffered']
    #allocation8 [shape = 'u8[32768]{0}', space=vmem, size = 0x8000, scoped, tag = 'input window, operand 4, single buffered']
    #allocation9 [shape = 's32[1]{0}', space=sflag, size = 0x4, scoped, tag = 'scoped memory for tpu_custom_call.1']
    #allocation10 [shape = 'u8[8192]{0}', space=vmem, size = 0x2000, scoped, tag = 'output window, operand 0, single buffered']
    %11 = vsyncpa [#allocation3], 0
    %12 = vsyncpa [#allocation6], 0
    %13 = vsyncpa [#allocation9], 0
    %14 = vsyncpa [#allocation4], 0
    // Predicated region
    $region2: #{tpu_custom_call.1} parent=1 // pred_check
      _
    $region3: #{tpu_custom_call.1} parent=1 // pred_check_branch
      %16 = sbr.rel (0) target = $region5
    $region4: #{tpu_custom_call.1} parent=1 // pred_region
      %s18 = ssub.s32 128, 128
      %19 = vsyncadd [#allocation3], %s18
      %s20 = sshll.u32 [#allocation2], 4
      %s21 = int_to_ptr.vmem [resolvable:$true] %s20
      %26 = dma.hbm_to_vmem [thread:$0]  %s0, 128, %s21, [#allocation3], 64, 64, 4
    $region5: #{tpu_custom_call.1} parent=1 // pred_fallthru
      _
    // Predicated region
    $region6: #{tpu_custom_call.1} parent=1 // pred_check
      _
    $region7: #{tpu_custom_call.1} parent=1 // pred_check_branch
      %28 = sbr.rel (0) target = $region9
    $region8: #{tpu_custom_call.1} parent=1 // pred_region
      %s30 = ssub.s32 3072, 3072
      %31 = vsyncadd [#allocation6], %s30
      %s32 = sshll.u32 [#allocation5], 4
      %s33 = int_to_ptr.vmem [resolvable:$true] %s32
      %38 = dma.hbm_to_vmem [thread:$0]  %s1, 3072, %s33, [#allocation6], 192, 192, 12
    $region9: #{tpu_custom_call.1} parent=1 // pred_fallthru
      _
    // Predicated region
    $region10: #{tpu_custom_call.1} parent=1 // pred_check
      _
    $region11: #{tpu_custom_call.1} parent=1 // pred_check_branch
      %40 = sbr.rel (0) target = $region13
    $region12: #{tpu_custom_call.1} parent=1 // pred_region
      _
    $region13: #{tpu_custom_call.1} parent=1 // pred_fallthru
      _
    // Predicated region
    $region14: #{tpu_custom_call.1} parent=1 // pred_check
      _
    $region15: #{tpu_custom_call.1} parent=1 // pred_check_branch
      %42 = sbr.rel (0) target = $region17
    $region16: #{tpu_custom_call.1} parent=1 // pred_region
      %s44 = ssub.s32 1024, 1024
      %45 = vsyncadd [#allocation6], %s44
      %s46 = sshll.u32 [#allocation7], 4
      %s47 = int_to_ptr.vmem [resolvable:$true] %s46
      %52 = dma.hbm_to_vmem [thread:$0]  %s3, 1024, %s47, [#allocation6], 64, 64, 4
    $region17: #{tpu_custom_call.1} parent=1 // pred_fallthru
      _
    // Predicated region
    $region18: #{tpu_custom_call.1} parent=1 // pred_check
      _
    $region19: #{tpu_custom_call.1} parent=1 // pred_check_branch
      %54 = sbr.rel (0) target = $region21
    $region20: #{tpu_custom_call.1} parent=1 // pred_region
      %s56 = ssub.s32 1024, 1024
      %57 = vsyncadd [#allocation9], %s56
      %s58 = sshll.u32 [#allocation8], 4
      %s59 = int_to_ptr.vmem [resolvable:$true] %s58
      %64 = dma.hbm_to_vmem [thread:$0]  %s4, 1024, %s59, [#allocation9], 64, 64, 4
    $region21: #{tpu_custom_call.1} parent=1 // pred_fallthru
      _
    // Predicated region
    $region22: #{tpu_custom_call.1} parent=1 // pred_check
      _
    $region23: #{tpu_custom_call.1} parent=1 // pred_check_branch
      %66 = sbr.rel (0) target = $region25
    $region24: #{tpu_custom_call.1} parent=1 // pred_region
      _
    $region25: #{tpu_custom_call.1} parent=1 // pred_fallthru
      _
    // Predicated region
    $region26: #{tpu_custom_call.1} parent=1 // pred_check
      _
    $region27: #{tpu_custom_call.1} parent=1 // pred_check_branch
      %68 = sbr.rel (0) target = $region29
    $region28: #{tpu_custom_call.1} parent=1 // pred_region
      %69 = dma.done [#allocation3], 128
    $region29: #{tpu_custom_call.1} parent=1 // pred_fallthru
      _
    // Predicated region
    $region30: #{tpu_custom_call.1} parent=1 // pred_check
      _
    $region31: #{tpu_custom_call.1} parent=1 // pred_check_branch
      %71 = sbr.rel (0) target = $region33
    $region32: #{tpu_custom_call.1} parent=1 // pred_region
      %72 = dma.done [#allocation6], 3072
    $region33: #{tpu_custom_call.1} parent=1 // pred_fallthru
      _
    // Predicated region
    $region34: #{tpu_custom_call.1} parent=1 // pred_check
      _
    $region35: #{tpu_custom_call.1} parent=1 // pred_check_branch
      %74 = sbr.rel (0) target = $region37
    $region36: #{tpu_custom_call.1} parent=1 // pred_region
      %75 = dma.done [#allocation6], 1024
    $region37: #{tpu_custom_call.1} parent=1 // pred_fallthru
      _
    // Predicated region
    $region38: #{tpu_custom_call.1} parent=1 // pred_check
      _
    $region39: #{tpu_custom_call.1} parent=1 // pred_check_branch
      %77 = sbr.rel (0) target = $region41
    $region40: #{tpu_custom_call.1} parent=1 // pred_region
      %78 = dma.done [#allocation9], 1024
    $region41: #{tpu_custom_call.1} parent=1 // pred_fallthru
      _
    %v80 = vld [vmem:[#allocation2] sm:$0xf]
    %v81 = vld [vmem:[#allocation2 + $0x4] sm:$0xf]
    %v82 = vld [vmem:[#allocation5] sm:$0xff]
    %v83 = vld [vmem:[#allocation5 + $0x8] sm:$0xf]
    %v84 = vld [vmem:[#allocation5 + $0xc] sm:$0xff]
    %v85 = vld [vmem:[#allocation5 + $0x14] sm:$0xf]
    %v86 = vld [vmem:[#allocation5 + $0x18] sm:$0xff]
    %v87 = vld [vmem:[#allocation5 + $0x20] sm:$0xf]
    %v88 = vld [vmem:[#allocation5 + $0x24] sm:$0xff]
    %v89 = vld [vmem:[#allocation5 + $0x2c] sm:$0xf]
    %v90 = vld [vmem:[#allocation5 + $0x30] sm:$0xff]
    %v91 = vld [vmem:[#allocation5 + $0x38] sm:$0xf]
    %v92 = vld [vmem:[#allocation5 + $0x3c] sm:$0xff]
    %v93 = vld [vmem:[#allocation5 + $0x44] sm:$0xf]
    %v94 = vld [vmem:[#allocation5 + $0x48] sm:$0xff]
    %v95 = vld [vmem:[#allocation5 + $0x50] sm:$0xf]
    %v96 = vld [vmem:[#allocation5 + $0x54] sm:$0xff]
    %v97 = vld [vmem:[#allocation5 + $0x5c] sm:$0xf]
    %v98 = vld [vmem:[#allocation5 + $0x60] sm:$0xff]
    %v99 = vld [vmem:[#allocation5 + $0x68] sm:$0xf]
    %v100 = vld [vmem:[#allocation5 + $0x6c] sm:$0xff]
    %v101 = vld [vmem:[#allocation5 + $0x74] sm:$0xf]
    %v102 = vld [vmem:[#allocation5 + $0x78] sm:$0xff]
    %v103 = vld [vmem:[#allocation5 + $0x80] sm:$0xf]
    %v104 = vld [vmem:[#allocation5 + $0x84] sm:$0xff]
    %v105 = vld [vmem:[#allocation5 + $0x8c] sm:$0xf]
    %v106 = vld [vmem:[#allocation5 + $0x90] sm:$0xff]
    %v107 = vld [vmem:[#allocation5 + $0x98] sm:$0xf]
    %v108 = vld [vmem:[#allocation5 + $0x9c] sm:$0xff]
    %v109 = vld [vmem:[#allocation5 + $0xa4] sm:$0xf]
    %v110 = vld [vmem:[#allocation5 + $0xa8] sm:$0xff]
    %v111 = vld [vmem:[#allocation5 + $0xb0] sm:$0xf]
    %v112 = vld [vmem:[#allocation5 + $0xb4] sm:$0xff]
    %v113 = vld [vmem:[#allocation5 + $0xbc] sm:$0xf]
    %v114 = vld [vmem:[%s2] sm:$0x7]
    %v116 = vlaneseq
    %v117 = vshrl.u32 %v116, 7
    %v118 = vsub.s32 0, %v117
    %v119 = vrot.slane %v114, %v118
    %v120 = vlaneseq
    %v121 = vshrl.u32 %v120, 7
    %v122 = vsub.s32 1, %v121
    %v123 = vrot.slane %v114, %v122
    %v124 = vlaneseq
    %v125 = vshrl.u32 %v124, 7
    %v126 = vsub.s32 2, %v125
    %v127 = vrot.slane %v114, %v126
    %v133 = vunpack.c.l.b16 %v80
    %v134 = vunpack.c.l.b16 %v81
    %v135 = vpack.c.b16 %v134, %v133
    %v169 = vunpack.c.l.b16 %v82
    %v170 = vunpack.c.h.b16 %v82
    %v171 = vunpack.c.l.b16 %v83
    %v172 = vunpack.c.l.b16 %v84
    %v173 = vunpack.c.h.b16 %v84
    %v174 = vunpack.c.l.b16 %v85
    %v175 = vunpack.c.l.b16 %v86
    %v176 = vunpack.c.h.b16 %v86
    %v177 = vunpack.c.l.b16 %v87
    %v178 = vunpack.c.l.b16 %v88
    %v179 = vunpack.c.h.b16 %v88
    %v180 = vunpack.c.l.b16 %v89
    %v181 = vunpack.c.l.b16 %v90
    %v182 = vunpack.c.h.b16 %v90
    %v183 = vunpack.c.l.b16 %v91
    %v184 = vunpack.c.l.b16 %v92
    %v185 = vunpack.c.h.b16 %v92
    %v186 = vunpack.c.l.b16 %v93
    %v187 = vunpack.c.l.b16 %v94
    %v188 = vunpack.c.h.b16 %v94
    %v189 = vunpack.c.l.b16 %v95
    %v190 = vunpack.c.l.b16 %v96
    %v191 = vunpack.c.h.b16 %v96
    %v192 = vunpack.c.l.b16 %v97
    %v193 = vunpack.c.l.b16 %v98
    %v194 = vunpack.c.h.b16 %v98
    %v195 = vunpack.c.l.b16 %v99
    %v196 = vunpack.c.l.b16 %v100
    %v197 = vunpack.c.h.b16 %v100
    %v198 = vunpack.c.l.b16 %v101
    %v199 = vunpack.c.l.b16 %v102
    %v200 = vunpack.c.h.b16 %v102
    %v201 = vunpack.c.l.b16 %v103
    %v202 = vunpack.c.l.b16 %v104
    %v203 = vunpack.c.h.b16 %v104
    %v204 = vunpack.c.l.b16 %v105
    %v205 = vunpack.c.l.b16 %v106
    %v206 = vunpack.c.h.b16 %v106
    %v207 = vunpack.c.l.b16 %v107
    %v208 = vunpack.c.l.b16 %v108
    %v209 = vunpack.c.h.b16 %v108
    %v210 = vunpack.c.l.b16 %v109
    %v211 = vunpack.c.l.b16 %v110
    %v212 = vunpack.c.h.b16 %v110
    %v213 = vunpack.c.l.b16 %v111
    %v214 = vunpack.c.l.b16 %v112
    %v215 = vunpack.c.h.b16 %v112
    %v216 = vunpack.c.l.b16 %v113
    %v217 = vpack.c.b16 %v172, %v169
    %v218 = vpack.c.b16 %v173, %v170
    %v219 = vpack.c.b16 %v174, %v171
    %v220 = vpack.c.b16 %v178, %v175
    %v221 = vpack.c.b16 %v179, %v176
    %v222 = vpack.c.b16 %v180, %v177
    %v223 = vpack.c.b16 %v184, %v181
    %v224 = vpack.c.b16 %v185, %v182
    %v225 = vpack.c.b16 %v186, %v183
    %v226 = vpack.c.b16 %v190, %v187
    %v227 = vpack.c.b16 %v191, %v188
    %v228 = vpack.c.b16 %v192, %v189
    %v229 = vpack.c.b16 %v196, %v193
    %v230 = vpack.c.b16 %v197, %v194
    %v231 = vpack.c.b16 %v198, %v195
    %v232 = vpack.c.b16 %v202, %v199
    %v233 = vpack.c.b16 %v203, %v200
    %v234 = vpack.c.b16 %v204, %v201
    %v235 = vpack.c.b16 %v208, %v205
    %v236 = vpack.c.b16 %v209, %v206
    %v237 = vpack.c.b16 %v210, %v207
    %v238 = vpack.c.b16 %v214, %v211
    %v239 = vpack.c.b16 %v215, %v212
    %v240 = vpack.c.b16 %v216, %v213
    %265 = vmatprep.subr.bf16.mxu0 %v239
    %266 = vmatpush1.bf16.msra.mxu0 %v238
    %267 = vmatprep.subr.bf16.mxu0 %v236
    %268 = vmatpush1.bf16.msra.mxu0 %v235
    %269 = vmatprep.subr.bf16.mxu0 %v233
    %270 = vmatpush1.bf16.msra.mxu0 %v232
    %271 = vmatprep.subr.bf16.mxu0 %v230
    %272 = vmatpush1.bf16.msra.mxu0 %v229
    %273 = vmatprep.subr.bf16.mxu0 %v227
    %274 = vmatpush1.bf16.msra.mxu0 %v226
    %275 = vmatprep.subr.bf16.mxu0 %v224
    %276 = vmatpush1.bf16.msra.mxu0 %v223
    %277 = vmatprep.subr.bf16.mxu0 %v221
    %278 = vmatpush1.bf16.msra.mxu0 %v220
    %279 = vmatprep.subr.bf16.mxu0 %v218
    %280 = vmatpush1.bf16.msra.mxu0 %v217
    %281 = vmatprep.subr.bf16.mxu0 0
    %282 = vmatpush2.bf16.msra.mxu0 0
    %283 = vmatprep.subr.bf16.mxu0 0
    %284 = vmatpush2.bf16.msra.mxu0 0
    %285 = vmatprep.subr.bf16.mxu0 0
    %286 = vmatpush2.bf16.msra.mxu0 0
    %287 = vmatprep.subr.bf16.mxu0 0
    %288 = vmatpush2.bf16.msra.mxu0 0
    %289 = vmatprep.subr.bf16.mxu0 0
    %290 = vmatpush2.bf16.msra.mxu0 0
    %291 = vmatprep.subr.bf16.mxu0 0
    %292 = vmatpush2.bf16.msra.mxu0 0
    %293 = vmatprep.subr.bf16.mxu0 0
    %294 = vmatpush2.bf16.msra.mxu0 0
    %295 = vmatprep.subr.bf16.mxu0 0
    %296 = vmatpush2.bf16.msra.mxu0 0
    %297 = vmatprep.mubr.bf16.mxu0 0
    %298 = vmatmul.mubr.bf16.gmra.mxu0 %v135
    %v299 = vpop.f32.mrf.mxu0
    %v300 = vadd.f32 %v119, %v299
    %v301 = vpop.f32.mrf.mxu0
    %v302 = vadd.f32 %v123, %v301
    %v303 = vpop.f32.mrf.mxu0
    %v304 = vadd.f32 %v119, %v303
    %v305 = vpop.f32.mrf.mxu0
    %v306 = vadd.f32 %v123, %v305
    %307 = vdwg.mxu0
    %308 = vmatprep.subr.bf16.mxu0 0
    %309 = vmatpush1.bf16.msra.mxu0 %v240
    %310 = vmatprep.subr.bf16.mxu0 0
    %311 = vmatpush1.bf16.msra.mxu0 %v237
    %312 = vmatprep.subr.bf16.mxu0 0
    %313 = vmatpush1.bf16.msra.mxu0 %v234
    %314 = vmatprep.subr.bf16.mxu0 0
    %315 = vmatpush1.bf16.msra.mxu0 %v231
    %316 = vmatprep.subr.bf16.mxu0 0
    %317 = vmatpush1.bf16.msra.mxu0 %v228
    %318 = vmatprep.subr.bf16.mxu0 0
    %319 = vmatpush1.bf16.msra.mxu0 %v225
    %320 = vmatprep.subr.bf16.mxu0 0
    %321 = vmatpush1.bf16.msra.mxu0 %v222
    %322 = vmatprep.subr.bf16.mxu0 0
    %323 = vmatpush1.bf16.msra.mxu0 %v219
    %324 = vmatprep.subr.bf16.mxu0 0
    %325 = vmatpush2.bf16.msra.mxu0 0
    %326 = vmatprep.subr.bf16.mxu0 0
    %327 = vmatpush2.bf16.msra.mxu0 0
    %328 = vmatprep.subr.bf16.mxu0 0
    %329 = vmatpush2.bf16.msra.mxu0 0
    %330 = vmatprep.subr.bf16.mxu0 0
    %331 = vmatpush2.bf16.msra.mxu0 0
    %332 = vmatprep.subr.bf16.mxu0 0
    %333 = vmatpush2.bf16.msra.mxu0 0
    %334 = vmatprep.subr.bf16.mxu0 0
    %335 = vmatpush2.bf16.msra.mxu0 0
    %336 = vmatprep.subr.bf16.mxu0 0
    %337 = vmatpush2.bf16.msra.mxu0 0
    %338 = vmatprep.subr.bf16.mxu0 0
    %339 = vmatpush2.bf16.msra.mxu0 0
    %340 = vmatprep.mubr.bf16.mxu0 0
    %341 = vmatmul.mubr.bf16.gmra.mxu0 %v135
    %v342 = vpop.f32.mrf.mxu0
    %v343 = vadd.f32 %v127, %v342
    %v344 = vpop.f32.mrf.mxu0
    %v345 = vpop.f32.mrf.mxu0
    %v346 = vadd.f32 %v127, %v345
    %v347 = vpop.f32.mrf.mxu0
    %348 = vdwg.mxu0
    %v349 = vmul.f32 %v302, %v300
    %v350 = vmul.f32 %v306, %v304
    %v351 = vpack.c.bf16 %v350, %v349
    %v352 = vld [vmem:[#allocation7] sm:$0xf]
    %v353 = vld [vmem:[#allocation7 + $0x4] sm:$0xf]
    %v354 = vld [vmem:[#allocation7 + $0x8] sm:$0xf]
    %v355 = vld [vmem:[#allocation7 + $0xc] sm:$0xf]
    %v356 = vld [vmem:[#allocation7 + $0x10] sm:$0xf]
    %v357 = vld [vmem:[#allocation7 + $0x14] sm:$0xf]
    %v358 = vld [vmem:[#allocation7 + $0x18] sm:$0xf]
    %v359 = vld [vmem:[#allocation7 + $0x1c] sm:$0xf]
    %v360 = vld [vmem:[#allocation7 + $0x20] sm:$0xf]
    %v361 = vld [vmem:[#allocation7 + $0x24] sm:$0xf]
    %v362 = vld [vmem:[#allocation7 + $0x28] sm:$0xf]
    %v363 = vld [vmem:[#allocation7 + $0x2c] sm:$0xf]
    %v364 = vld [vmem:[#allocation7 + $0x30] sm:$0xf]
    %v365 = vld [vmem:[#allocation7 + $0x34] sm:$0xf]
    %v366 = vld [vmem:[#allocation7 + $0x38] sm:$0xf]
    %v367 = vld [vmem:[#allocation7 + $0x3c] sm:$0xf]
    %v384 = vunpack.c.l.b16 %v352
    %v385 = vunpack.c.l.b16 %v353
    %v386 = vunpack.c.l.b16 %v354
    %v387 = vunpack.c.l.b16 %v355
    %v388 = vunpack.c.l.b16 %v356
    %v389 = vunpack.c.l.b16 %v357
    %v390 = vunpack.c.l.b16 %v358
    %v391 = vunpack.c.l.b16 %v359
    %v392 = vunpack.c.l.b16 %v360
    %v393 = vunpack.c.l.b16 %v361
    %v394 = vunpack.c.l.b16 %v362
    %v395 = vunpack.c.l.b16 %v363
    %v396 = vunpack.c.l.b16 %v364
    %v397 = vunpack.c.l.b16 %v365
    %v398 = vunpack.c.l.b16 %v366
    %v399 = vunpack.c.l.b16 %v367
    %v400 = vpack.c.b16 %v385, %v384
    %v401 = vpack.c.b16 %v387, %v386
    %v402 = vpack.c.b16 %v389, %v388
    %v403 = vpack.c.b16 %v391, %v390
    %v404 = vpack.c.b16 %v393, %v392
    %v405 = vpack.c.b16 %v395, %v394
    %v406 = vpack.c.b16 %v397, %v396
    %v407 = vpack.c.b16 %v399, %v398
    %416 = vmatprep.subr.bf16.mxu0 0
    %417 = vmatpush1.bf16.msra.mxu0 %v407
    %418 = vmatprep.subr.bf16.mxu0 0
    %419 = vmatpush1.bf16.msra.mxu0 %v406
    %420 = vmatprep.subr.bf16.mxu0 0
    %421 = vmatpush1.bf16.msra.mxu0 %v405
    %422 = vmatprep.subr.bf16.mxu0 0
    %423 = vmatpush1.bf16.msra.mxu0 %v404
    %424 = vmatprep.subr.bf16.mxu0 0
    %425 = vmatpush1.bf16.msra.mxu0 %v403
    %426 = vmatprep.subr.bf16.mxu0 0
    %427 = vmatpush1.bf16.msra.mxu0 %v402
    %428 = vmatprep.subr.bf16.mxu0 0
    %429 = vmatpush1.bf16.msra.mxu0 %v401
    %430 = vmatprep.subr.bf16.mxu0 0
    %431 = vmatpush1.bf16.msra.mxu0 %v400
    %432 = vmatprep.subr.bf16.mxu0 0
    %433 = vmatpush2.bf16.msra.mxu0 0
    %434 = vmatprep.subr.bf16.mxu0 0
    %435 = vmatpush2.bf16.msra.mxu0 0
    %436 = vmatprep.subr.bf16.mxu0 0
    %437 = vmatpush2.bf16.msra.mxu0 0
    %438 = vmatprep.subr.bf16.mxu0 0
    %439 = vmatpush2.bf16.msra.mxu0 0
    %440 = vmatprep.subr.bf16.mxu0 0
    %441 = vmatpush2.bf16.msra.mxu0 0
    %442 = vmatprep.subr.bf16.mxu0 0
    %443 = vmatpush2.bf16.msra.mxu0 0
    %444 = vmatprep.subr.bf16.mxu0 0
    %445 = vmatpush2.bf16.msra.mxu0 0
    %446 = vmatprep.subr.bf16.mxu0 0
    %447 = vmatpush2.bf16.msra.mxu0 0
    %448 = vmatprep.mubr.bf16.mxu0 0
    %449 = vmatmul.mubr.bf16.gmra.mxu0 %v351
    %v450 = vpop.f32.mrf.mxu0
    %v451 = vadd.f32 0.0, %v450
    %v452 = vpop.f32.mrf.mxu0
    %v453 = vpop.f32.mrf.mxu0
    %v454 = vadd.f32 0.0, %v453
    %v455 = vpop.f32.mrf.mxu0
    %456 = vdwg.mxu0
    %v457 = vmul.f32 %v451, 0.35355338
    %v458 = vmul.f32 %v454, 0.35355338
    %v459 = vsub.f32 %v457, %v457
    %v460 = vsub.f32 %v458, %v458
    %v461 = vmul.f32 %v459, 1.442695
    %v462 = vpow.pop %v461
    %v463 = vmul.f32 %v460, 1.442695
    %v464 = vpow.pop %v463
    %v465 = vmul.f32 %v462, %v343
    %v466 = vmul.f32 %v464, %v346
    %v467 = vpack.c.bf16 %v466, %v465
    %v468 = vld [vmem:[#allocation8] sm:$0xf]
    %v469 = vld [vmem:[#allocation8 + $0x4] sm:$0xf]
    %v470 = vld [vmem:[#allocation8 + $0x8] sm:$0xf]
    %v471 = vld [vmem:[#allocation8 + $0xc] sm:$0xf]
    %v472 = vld [vmem:[#allocation8 + $0x10] sm:$0xf]
    %v473 = vld [vmem:[#allocation8 + $0x14] sm:$0xf]
    %v474 = vld [vmem:[#allocation8 + $0x18] sm:$0xf]
    %v475 = vld [vmem:[#allocation8 + $0x1c] sm:$0xf]
    %v476 = vld [vmem:[#allocation8 + $0x20] sm:$0xf]
    %v477 = vld [vmem:[#allocation8 + $0x24] sm:$0xf]
    %v478 = vld [vmem:[#allocation8 + $0x28] sm:$0xf]
    %v479 = vld [vmem:[#allocation8 + $0x2c] sm:$0xf]
    %v480 = vld [vmem:[#allocation8 + $0x30] sm:$0xf]
    %v481 = vld [vmem:[#allocation8 + $0x34] sm:$0xf]
    %v482 = vld [vmem:[#allocation8 + $0x38] sm:$0xf]
    %v483 = vld [vmem:[#allocation8 + $0x3c] sm:$0xf]
    %v484 = vld [vmem:[%s5] sm:$0x1]
    %v486 = vlaneseq
    %v487 = vshrl.u32 %v486, 7
    %v488 = vsub.s32 0, %v487
    %v489 = vrot.slane %v484, %v488
    %v507 = vunpack.c.l.b16 %v468
    %v508 = vunpack.c.l.b16 %v469
    %v509 = vunpack.c.l.b16 %v470
    %v510 = vunpack.c.l.b16 %v471
    %v511 = vunpack.c.l.b16 %v472
    %v512 = vunpack.c.l.b16 %v473
    %v513 = vunpack.c.l.b16 %v474
    %v514 = vunpack.c.l.b16 %v475
    %v515 = vunpack.c.l.b16 %v476
    %v516 = vunpack.c.l.b16 %v477
    %v517 = vunpack.c.l.b16 %v478
    %v518 = vunpack.c.l.b16 %v479
    %v519 = vunpack.c.l.b16 %v480
    %v520 = vunpack.c.l.b16 %v481
    %v521 = vunpack.c.l.b16 %v482
    %v522 = vunpack.c.l.b16 %v483
    %v523 = vpack.c.b16 %v508, %v507
    %v524 = vpack.c.b16 %v510, %v509
    %v525 = vpack.c.b16 %v512, %v511
    %v526 = vpack.c.b16 %v514, %v513
    %v527 = vpack.c.b16 %v516, %v515
    %v528 = vpack.c.b16 %v518, %v517
    %v529 = vpack.c.b16 %v520, %v519
    %v530 = vpack.c.b16 %v522, %v521
    %539 = vmatprep.subr.bf16.mxu0 0
    %540 = vmatpush1.bf16.msra.mxu0 %v530
    %541 = vmatprep.subr.bf16.mxu0 0
    %542 = vmatpush1.bf16.msra.mxu0 %v529
    %543 = vmatprep.subr.bf16.mxu0 0
    %544 = vmatpush1.bf16.msra.mxu0 %v528
    %545 = vmatprep.subr.bf16.mxu0 0
    %546 = vmatpush1.bf16.msra.mxu0 %v527
    %547 = vmatprep.subr.bf16.mxu0 0
    %548 = vmatpush1.bf16.msra.mxu0 %v526
    %549 = vmatprep.subr.bf16.mxu0 0
    %550 = vmatpush1.bf16.msra.mxu0 %v525
    %551 = vmatprep.subr.bf16.mxu0 0
    %552 = vmatpush1.bf16.msra.mxu0 %v524
    %553 = vmatprep.subr.bf16.mxu0 0
    %554 = vmatpush1.bf16.msra.mxu0 %v523
    %555 = vmatprep.subr.bf16.mxu0 0
    %556 = vmatpush2.bf16.msra.mxu0 0
    %557 = vmatprep.subr.bf16.mxu0 0
    %558 = vmatpush2.bf16.msra.mxu0 0
    %559 = vmatprep.subr.bf16.mxu0 0
    %560 = vmatpush2.bf16.msra.mxu0 0
    %561 = vmatprep.subr.bf16.mxu0 0
    %562 = vmatpush2.bf16.msra.mxu0 0
    %563 = vmatprep.subr.bf16.mxu0 0
    %564 = vmatpush2.bf16.msra.mxu0 0
    %565 = vmatprep.subr.bf16.mxu0 0
    %566 = vmatpush2.bf16.msra.mxu0 0
    %567 = vmatprep.subr.bf16.mxu0 0
    %568 = vmatpush2.bf16.msra.mxu0 0
    %569 = vmatprep.subr.bf16.mxu0 0
    %570 = vmatpush2.bf16.msra.mxu0 0
    %571 = vmatprep.mubr.bf16.mxu0 0
    %572 = vmatmul.mubr.bf16.gmra.mxu0 %v467
    %v573 = vpop.f32.mrf.mxu0
    %v574 = vadd.f32 %v489, %v573
    %v575 = vpop.f32.mrf.mxu0
    %v576 = vpop.f32.mrf.mxu0
    %v577 = vadd.f32 %v489, %v576
    %v578 = vpop.f32.mrf.mxu0
    %579 = vdwg.mxu0
    %580 = vst [vmem:[#allocation10] sm:$0xff] %v574
    %581 = vst [vmem:[#allocation10 + $0x8] sm:$0xff] %v577
    // Predicated region
    $region42: #{tpu_custom_call.1} parent=1 // pred_check
      _
    $region43: #{tpu_custom_call.1} parent=1 // pred_check_branch
      %583 = sbr.rel (0) target = $region45
    $region44: #{tpu_custom_call.1} parent=1 // pred_region
      %s585 = ssub.s32 256, 256
      %586 = vsyncadd [#allocation4], %s585
      %s587 = sshll.u32 [#allocation10], 4
      %s588 = int_to_ptr.vmem [resolvable:$true] %s587
      %593 = dma.vmem_to_hbm [thread:$0]  %s588, 256, %s6, [#allocation4], 128, 128, 8
    $region45: #{tpu_custom_call.1} parent=1 // pred_fallthru
      _
    // Predicated region
    $region46: #{tpu_custom_call.1} parent=1 // pred_check
      _
    $region47: #{tpu_custom_call.1} parent=1 // pred_check_branch
      %595 = sbr.rel (0) target = $region49
    $region48: #{tpu_custom_call.1} parent=1 // pred_region
      %596 = dma.done [#allocation4], 256
    $region49: #{tpu_custom_call.1} parent=1 // pred_fallthru
      _
    %597 = vsyncpa [#allocation3], 1
    %598 = vsyncpa [#allocation6], 1
    %599 = vsyncpa [#allocation9], 1
    %600 = vsyncpa [#allocation4], 1

// kernel: tpu_custom_call.1
$region0: #{tpu_custom_call.1}
  #allocation0 [shape = 'u32[]', space=smem, size = 0x4, offset = 0x4, fixed_abs, tag = 'smem constant byte address 0x4 - core index']
  #allocation1 [shape = 'u32[144,128]{1,0:T(1,128)}', space=vmem, size = 0x12000, scoped, tag = 'internal scratch']
  %s0 = inlined_call_operand.hbm [shape: bf16[16,128], index: 0, kind: input, shape index: {}]
  %s1 = inlined_call_operand.hbm [shape: bf16[128,384], index: 1, kind: input, shape index: {}]
  %s2 = inlined_call_operand.vmem [shape: f32[1,384], index: 2, kind: input, shape index: {}]
  %s3 = inlined_call_operand.hbm [shape: bf16[128,128], index: 3, kind: input, shape index: {}]
  %s4 = inlined_call_operand.hbm [shape: bf16[128,128], index: 4, kind: input, shape index: {}]
  %s5 = inlined_call_operand.vmem [shape: f32[1,128], index: 5, kind: input, shape index: {}]
  %s6 = inlined_call_operand.hbm [shape: f32[16,128], index: 6, kind: output, shape index: {}]
  %s7 = sld [smem:[#allocation0]]
  $region50: #{tpu_custom_call.1} parent=0
    _
  %s9 = ssub.s32 1, %s7
  %s10 = scalar_select 0, %s9, %s7
  $region1: #{tpu_custom_call.1} parent=0
    #allocation2 [shape = 'u8[4096]{0}', space=vmem, size = 0x1000, scoped, tag = 'input window, operand 0, single buffered']
    #allocation3 [shape = 's32[1]{0}', space=sflag, size = 0x4, scoped, tag = 'scoped memory for tpu_custom_call.1']
    #allocation4 [shape = 's32[1]{0}', space=sflag, size = 0x4, scoped, tag = 'scoped memory for tpu_custom_call.1']
    #allocation5 [shape = 'u8[98304]{0}', space=vmem, size = 0x18000, scoped, tag = 'input window, operand 1, single buffered']
    #allocation6 [shape = 's32[1]{0}', space=sflag, size = 0x4, scoped, tag = 'scoped memory for tpu_custom_call.1']
    #allocation7 [shape = 'u8[32768]{0}', space=vmem, size = 0x8000, scoped, tag = 'input window, operand 3, single buffered']
    #allocation8 [shape = 'u8[32768]{0}', space=vmem, size = 0x8000, scoped, tag = 'input window, operand 4, single buffered']
    #allocation9 [shape = 's32[1]{0}', space=sflag, size = 0x4, scoped, tag = 'scoped memory for tpu_custom_call.1']
    #allocation10 [shape = 'u8[8192]{0}', space=vmem, size = 0x2000, scoped, tag = 'output window, operand 0, single buffered']
    %11 = vsyncpa [#allocation3], 0
    %12 = vsyncpa [#allocation6], 0
    %13 = vsyncpa [#allocation9], 0
    %14 = vsyncpa [#allocation4], 0
    // Predicated region
    $region2: #{tpu_custom_call.1} parent=1 // pred_check
      _
    $region3: #{tpu_custom_call.1} parent=1 // pred_check_branch
      %16 = sbr.rel (0) target = $region5
    $region4: #{tpu_custom_call.1} parent=1 // pred_region
      %s18 = ssub.s32 128, 128
      %19 = vsyncadd [#allocation3], %s18
      %s20 = sshll.u32 [#allocation2], 4
      %s21 = int_to_ptr.vmem [resolvable:$true] %s20
      %26 = dma.hbm_to_vmem [thread:$0]  %s0, 128, %s21, [#allocation3], 64, 64, 4
    $region5: #{tpu_custom_call.1} parent=1 // pred_fallthru
      _
    // Predicated region
    $region6: #{tpu_custom_call.1} parent=1 // pred_check
      _
    $region7: #{tpu_custom_call.1} parent=1 // pred_check_branch
      %28 = sbr.rel (0) target = $region9
    $region8: #{tpu_custom_call.1} parent=1 // pred_region
      %s30 = ssub.s32 3072, 3072
      %31 = vsyncadd [#allocation6], %s30
      %s32 = sshll.u32 [#allocation5], 4
      %s33 = int_to_ptr.vmem [resolvable:$true] %s32
      %38 = dma.hbm_to_vmem [thread:$0]  %s1, 3072, %s33, [#allocation6], 192, 192, 12
    $region9: #{tpu_custom_call.1} parent=1 // pred_fallthru
      _
    // Predicated region
    $region10: #{tpu_custom_call.1} parent=1 // pred_check
      _
    $region11: #{tpu_custom_call.1} parent=1 // pred_check_branch
      %40 = sbr.rel (0) target = $region13
    $region12: #{tpu_custom_call.1} parent=1 // pred_region
      _
    $region13: #{tpu_custom_call.1} parent=1 // pred_fallthru
      _
    // Predicated region
    $region14: #{tpu_custom_call.1} parent=1 // pred_check
      _
    $region15: #{tpu_custom_call.1} parent=1 // pred_check_branch
      %42 = sbr.rel (0) target = $region17
    $region16: #{tpu_custom_call.1} parent=1 // pred_region
      %s44 = ssub.s32 1024, 1024
      %45 = vsyncadd [#allocation6], %s44
      %s46 = sshll.u32 [#allocation7], 4
      %s47 = int_to_ptr.vmem [resolvable:$true] %s46
      %52 = dma.hbm_to_vmem [thread:$0]  %s3, 1024, %s47, [#allocation6], 64, 64, 4
    $region17: #{tpu_custom_call.1} parent=1 // pred_fallthru
      _
    // Predicated region
    $region18: #{tpu_custom_call.1} parent=1 // pred_check
      _
    $region19: #{tpu_custom_call.1} parent=1 // pred_check_branch
      %54 = sbr.rel (0) target = $region21
    $region20: #{tpu_custom_call.1} parent=1 // pred_region
      %s56 = ssub.s32 1024, 1024
      %57 = vsyncadd [#allocation9], %s56
      %s58 = sshll.u32 [#allocation8], 4
      %s59 = int_to_ptr.vmem [resolvable:$true] %s58
      %64 = dma.hbm_to_vmem [thread:$0]  %s4, 1024, %s59, [#allocation9], 64, 64, 4
    $region21: #{tpu_custom_call.1} parent=1 // pred_fallthru
      _
    // Predicated region
    $region22: #{tpu_custom_call.1} parent=1 // pred_check
      _
    $region23: #{tpu_custom_call.1} parent=1 // pred_check_branch
      %66 = sbr.rel (0) target = $region25
    $region24: #{tpu_custom_call.1} parent=1 // pred_region
      _
    $region25: #{tpu_custom_call.1} parent=1 // pred_fallthru
      _
    // Predicated region
    $region26: #{tpu_custom_call.1} parent=1 // pred_check
      _
    $region27: #{tpu_custom_call.1} parent=1 // pred_check_branch
      %68 = sbr.rel (0) target = $region29
    $region28: #{tpu_custom_call.1} parent=1 // pred_region
      %69 = dma.done [#allocation3], 128
    $region29: #{tpu_custom_call.1} parent=1 // pred_fallthru
      _
    // Predicated region
    $region30: #{tpu_custom_call.1} parent=1 // pred_check
      _
    $region31: #{tpu_custom_call.1} parent=1 // pred_check_branch
      %71 = sbr.rel (0) target = $region33
    $region32: #{tpu_custom_call.1} parent=1 // pred_region
      %72 = dma.done [#allocation6], 3072
    $region33: #{tpu_custom_call.1} parent=1 // pred_fallthru
      _
    // Predicated region
    $region34: #{tpu_custom_call.1} parent=1 // pred_check
      _
    $region35: #{tpu_custom_call.1} parent=1 // pred_check_branch
      %74 = sbr.rel (0) target = $region37
    $region36: #{tpu_custom_call.1} parent=1 // pred_region
      %75 = dma.done [#allocation6], 1024
    $region37: #{tpu_custom_call.1} parent=1 // pred_fallthru
      _
    // Predicated region
    $region38: #{tpu_custom_call.1} parent=1 // pred_check
      _
    $region39: #{tpu_custom_call.1} parent=1 // pred_check_branch
      %77 = sbr.rel (0) target = $region41
    $region40: #{tpu_custom_call.1} parent=1 // pred_region
      %78 = dma.done [#allocation9], 1024
    $region41: #{tpu_custom_call.1} parent=1 // pred_fallthru
      _
    %v80 = vld [vmem:[#allocation2] sm:$0xf]
    %v81 = vld [vmem:[#allocation2 + $0x4] sm:$0xf]
    %v82 = vld [vmem:[#allocation5] sm:$0xff]
    %v83 = vld [vmem:[#allocation5 + $0x8] sm:$0xf]
    %v84 = vld [vmem:[#allocation5 + $0xc] sm:$0xff]
    %v85 = vld [vmem:[#allocation5 + $0x14] sm:$0xf]
    %v86 = vld [vmem:[#allocation5 + $0x18] sm:$0xff]
    %v87 = vld [vmem:[#allocation5 + $0x20] sm:$0xf]
    %v88 = vld [vmem:[#allocation5 + $0x24] sm:$0xff]
    %v89 = vld [vmem:[#allocation5 + $0x2c] sm:$0xf]
    %v90 = vld [vmem:[#allocation5 + $0x30] sm:$0xff]
    %v91 = vld [vmem:[#allocation5 + $0x38] sm:$0xf]
    %v92 = vld [vmem:[#allocation5 + $0x3c] sm:$0xff]
    %v93 = vld [vmem:[#allocation5 + $0x44] sm:$0xf]
    %v94 = vld [vmem:[#allocation5 + $0x48] sm:$0xff]
    %v95 = vld [vmem:[#allocation5 + $0x50] sm:$0xf]
    %v96 = vld [vmem:[#allocation5 + $0x54] sm:$0xff]
    %v97 = vld [vmem:[#allocation5 + $0x5c] sm:$0xf]
    %v98 = vld [vmem:[#allocation5 + $0x60] sm:$0xff]
    %v99 = vld [vmem:[#allocation5 + $0x68] sm:$0xf]
    %v100 = vld [vmem:[#allocation5 + $0x6c] sm:$0xff]
    %v101 = vld [vmem:[#allocation5 + $0x74] sm:$0xf]
    %v102 = vld [vmem:[#allocation5 + $0x78] sm:$0xff]
    %v103 = vld [vmem:[#allocation5 + $0x80] sm:$0xf]
    %v104 = vld [vmem:[#allocation5 + $0x84] sm:$0xff]
    %v105 = vld [vmem:[#allocation5 + $0x8c] sm:$0xf]
    %v106 = vld [vmem:[#allocation5 + $0x90] sm:$0xff]
    %v107 = vld [vmem:[#allocation5 + $0x98] sm:$0xf]
    %v108 = vld [vmem:[#allocation5 + $0x9c] sm:$0xff]
    %v109 = vld [vmem:[#allocation5 + $0xa4] sm:$0xf]
    %v110 = vld [vmem:[#allocation5 + $0xa8] sm:$0xff]
    %v111 = vld [vmem:[#allocation5 + $0xb0] sm:$0xf]
    %v112 = vld [vmem:[#allocation5 + $0xb4] sm:$0xff]
    %v113 = vld [vmem:[#allocation5 + $0xbc] sm:$0xf]
    %v114 = vld [vmem:[%s2] sm:$0x7]
    %v116 = vlaneseq
    %v117 = vshrl.u32 %v116, 7
    %v118 = vsub.s32 0, %v117
    %v119 = vrot.slane %v114, %v118
    %v120 = vlaneseq
    %v121 = vshrl.u32 %v120, 7
    %v122 = vsub.s32 1, %v121
    %v123 = vrot.slane %v114, %v122
    %v124 = vlaneseq
    %v125 = vshrl.u32 %v124, 7
    %v126 = vsub.s32 2, %v125
    %v127 = vrot.slane %v114, %v126
    %v133 = vunpack.c.l.b16 %v80
    %v134 = vunpack.c.l.b16 %v81
    %v135 = vpack.c.b16 %v134, %v133
    %v169 = vunpack.c.l.b16 %v82
    %v170 = vunpack.c.h.b16 %v82
    %v171 = vunpack.c.l.b16 %v83
    %v172 = vunpack.c.l.b16 %v84
    %v173 = vunpack.c.h.b16 %v84
    %v174 = vunpack.c.l.b16 %v85
    %v175 = vunpack.c.l.b16 %v86
    %v176 = vunpack.c.h.b16 %v86
    %v177 = vunpack.c.l.b16 %v87
    %v178 = vunpack.c.l.b16 %v88
    %v179 = vunpack.c.h.b16 %v88
    %v180 = vunpack.c.l.b16 %v89
    %v181 = vunpack.c.l.b16 %v90
    %v182 = vunpack.c.h.b16 %v90
    %v183 = vunpack.c.l.b16 %v91
    %v184 = vunpack.c.l.b16 %v92
    %v185 = vunpack.c.h.b16 %v92
    %v186 = vunpack.c.l.b16 %v93
    %v187 = vunpack.c.l.b16 %v94
    %v188 = vunpack.c.h.b16 %v94
    %v189 = vunpack.c.l.b16 %v95
    %v190 = vunpack.c.l.b16 %v96
    %v191 = vunpack.c.h.b16 %v96
    %v192 = vunpack.c.l.b16 %v97
    %v193 = vunpack.c.l.b16 %v98
    %v194 = vunpack.c.h.b16 %v98
    %v195 = vunpack.c.l.b16 %v99
    %v196 = vunpack.c.l.b16 %v100
    %v197 = vunpack.c.h.b16 %v100
    %v198 = vunpack.c.l.b16 %v101
    %v199 = vunpack.c.l.b16 %v102
    %v200 = vunpack.c.h.b16 %v102
    %v201 = vunpack.c.l.b16 %v103
    %v202 = vunpack.c.l.b16 %v104
    %v203 = vunpack.c.h.b16 %v104
    %v204 = vunpack.c.l.b16 %v105
    %v205 = vunpack.c.l.b16 %v106
    %v206 = vunpack.c.h.b16 %v106
    %v207 = vunpack.c.l.b16 %v107
    %v208 = vunpack.c.l.b16 %v108
    %v209 = vunpack.c.h.b16 %v108
    %v210 = vunpack.c.l.b16 %v109
    %v211 = vunpack.c.l.b16 %v110
    %v212 = vunpack.c.h.b16 %v110
    %v213 = vunpack.c.l.b16 %v111
    %v214 = vunpack.c.l.b16 %v112
    %v215 = vunpack.c.h.b16 %v112
    %v216 = vunpack.c.l.b16 %v113
    %v217 = vpack.c.b16 %v172, %v169
    %v218 = vpack.c.b16 %v173, %v170
    %v219 = vpack.c.b16 %v174, %v171
    %v220 = vpack.c.b16 %v178, %v175
    %v221 = vpack.c.b16 %v179, %v176
    %v222 = vpack.c.b16 %v180, %v177
    %v223 = vpack.c.b16 %v184, %v181
    %v224 = vpack.c.b16 %v185, %v182
    %v225 = vpack.c.b16 %v186, %v183
    %v226 = vpack.c.b16 %v190, %v187
    %v227 = vpack.c.b16 %v191, %v188
    %v228 = vpack.c.b16 %v192, %v189
    %v229 = vpack.c.b16 %v196, %v193
    %v230 = vpack.c.b16 %v197, %v194
    %v231 = vpack.c.b16 %v198, %v195
    %v232 = vpack.c.b16 %v202, %v199
    %v233 = vpack.c.b16 %v203, %v200
    %v234 = vpack.c.b16 %v204, %v201
    %v235 = vpack.c.b16 %v208, %v205
    %v236 = vpack.c.b16 %v209, %v206
    %v237 = vpack.c.b16 %v210, %v207
    %v238 = vpack.c.b16 %v214, %v211
    %v239 = vpack.c.b16 %v215, %v212
    %v240 = vpack.c.b16 %v216, %v213
    %265 = vmatprep.subr.bf16.mxu0 %v239
    %266 = vmatpush1.bf16.msra.mxu0 %v238
    %267 = vmatprep.subr.bf16.mxu0 %v236
    %268 = vmatpush1.bf16.msra.mxu0 %v235
    %269 = vmatprep.subr.bf16.mxu0 %v233
    %270 = vmatpush1.bf16.msra.mxu0 %v232
    %271 = vmatprep.subr.bf16.mxu0 %v230
    %272 = vmatpush1.bf16.msra.mxu0 %v229
    %273 = vmatprep.subr.bf16.mxu0 %v227
    %274 = vmatpush1.bf16.msra.mxu0 %v226
    %275 = vmatprep.subr.bf16.mxu0 %v224
    %276 = vmatpush1.bf16.msra.mxu0 %v223
    %277 = vmatprep.subr.bf16.mxu0 %v221
    %278 = vmatpush1.bf16.msra.mxu0 %v220
    %279 = vmatprep.subr.bf16.mxu0 %v218
    %280 = vmatpush1.bf16.msra.mxu0 %v217
    %281 = vmatprep.subr.bf16.mxu0 0
    %282 = vmatpush2.bf16.msra.mxu0 0
    %283 = vmatprep.subr.bf16.mxu0 0
    %284 = vmatpush2.bf16.msra.mxu0 0
    %285 = vmatprep.subr.bf16.mxu0 0
    %286 = vmatpush2.bf16.msra.mxu0 0
    %287 = vmatprep.subr.bf16.mxu0 0
    %288 = vmatpush2.bf16.msra.mxu0 0
    %289 = vmatprep.subr.bf16.mxu0 0
    %290 = vmatpush2.bf16.msra.mxu0 0
    %291 = vmatprep.subr.bf16.mxu0 0
    %292 = vmatpush2.bf16.msra.mxu0 0
    %293 = vmatprep.subr.bf16.mxu0 0
    %294 = vmatpush2.bf16.msra.mxu0 0
    %295 = vmatprep.subr.bf16.mxu0 0
    %296 = vmatpush2.bf16.msra.mxu0 0
    %297 = vmatprep.mubr.bf16.mxu0 0
    %298 = vmatmul.mubr.bf16.gmra.mxu0 %v135
    %v299 = vpop.f32.mrf.mxu0
    %v300 = vadd.f32 %v119, %v299
    %v301 = vpop.f32.mrf.mxu0
    %v302 = vadd.f32 %v123, %v301
    %v303 = vpop.f32.mrf.mxu0
    %v304 = vadd.f32 %v119, %v303
    %v305 = vpop.f32.mrf.mxu0
    %v306 = vadd.f32 %v123, %v305
    %307 = vdwg.mxu0
    %308 = vmatprep.subr.bf16.mxu0 0
    %309 = vmatpush1.bf16.msra.mxu0 %v240
    %310 = vmatprep.subr.bf16.mxu0 0
    %311 = vmatpush1.bf16.msra.mxu0 %v237
    %312 = vmatprep.subr.bf16.mxu0 0
    %313 = vmatpush1.bf16.msra.mxu0 %v234
    %314 = vmatprep.subr.bf16.mxu0 0
    %315 = vmatpush1.bf16.msra.mxu0 %v231
    %316 = vmatprep.subr.bf16.mxu0 0
    %317 = vmatpush1.bf16.msra.mxu0 %v228
    %318 = vmatprep.subr.bf16.mxu0 0
    %319 = vmatpush1.bf16.msra.mxu0 %v225
    %320 = vmatprep.subr.bf16.mxu0 0
    %321 = vmatpush1.bf16.msra.mxu0 %v222
    %322 = vmatprep.subr.bf16.mxu0 0
    %323 = vmatpush1.bf16.msra.mxu0 %v219
    %324 = vmatprep.subr.bf16.mxu0 0
    %325 = vmatpush2.bf16.msra.mxu0 0
    %326 = vmatprep.subr.bf16.mxu0 0
    %327 = vmatpush2.bf16.msra.mxu0 0
    %328 = vmatprep.subr.bf16.mxu0 0
    %329 = vmatpush2.bf16.msra.mxu0 0
    %330 = vmatprep.subr.bf16.mxu0 0
    %331 = vmatpush2.bf16.msra.mxu0 0
    %332 = vmatprep.subr.bf16.mxu0 0
    %333 = vmatpush2.bf16.msra.mxu0 0
    %334 = vmatprep.subr.bf16.mxu0 0
    %335 = vmatpush2.bf16.msra.mxu0 0
    %336 = vmatprep.subr.bf16.mxu0 0
    %337 = vmatpush2.bf16.msra.mxu0 0
    %338 = vmatprep.subr.bf16.mxu0 0
    %339 = vmatpush2.bf16.msra.mxu0 0
    %340 = vmatprep.mubr.bf16.mxu0 0
    %341 = vmatmul.mubr.bf16.gmra.mxu0 %v135
    %v342 = vpop.f32.mrf.mxu0
    %v343 = vadd.f32 %v127, %v342
    %v344 = vpop.f32.mrf.mxu0
    %v345 = vpop.f32.mrf.mxu0
    %v346 = vadd.f32 %v127, %v345
    %v347 = vpop.f32.mrf.mxu0
    %348 = vdwg.mxu0
    %v349 = vmul.f32 %v302, %v300
    %v350 = vmul.f32 %v306, %v304
    %v351 = vpack.c.bf16 %v350, %v349
    %v352 = vld [vmem:[#allocation7] sm:$0xf]
    %v353 = vld [vmem:[#allocation7 + $0x4] sm:$0xf]
    %v354 = vld [vmem:[#allocation7 + $0x8] sm:$0xf]
    %v355 = vld [vmem:[#allocation7 + $0xc] sm:$0xf]
    %v356 = vld [vmem:[#allocation7 + $0x10] sm:$0xf]
    %v357 = vld [vmem:[#allocation7 + $0x14] sm:$0xf]
    %v358 = vld [vmem:[#allocation7 + $0x18] sm:$0xf]
    %v359 = vld [vmem:[#allocation7 + $0x1c] sm:$0xf]
    %v360 = vld [vmem:[#allocation7 + $0x20] sm:$0xf]
    %v361 = vld [vmem:[#allocation7 + $0x24] sm:$0xf]
    %v362 = vld [vmem:[#allocation7 + $0x28] sm:$0xf]
    %v363 = vld [vmem:[#allocation7 + $0x2c] sm:$0xf]
    %v364 = vld [vmem:[#allocation7 + $0x30] sm:$0xf]
    %v365 = vld [vmem:[#allocation7 + $0x34] sm:$0xf]
    %v366 = vld [vmem:[#allocation7 + $0x38] sm:$0xf]
    %v367 = vld [vmem:[#allocation7 + $0x3c] sm:$0xf]
    %v384 = vunpack.c.l.b16 %v352
    %v385 = vunpack.c.l.b16 %v353
    %v386 = vunpack.c.l.b16 %v354
    %v387 = vunpack.c.l.b16 %v355
    %v388 = vunpack.c.l.b16 %v356
    %v389 = vunpack.c.l.b16 %v357
    %v390 = vunpack.c.l.b16 %v358
    %v391 = vunpack.c.l.b16 %v359
    %v392 = vunpack.c.l.b16 %v360
    %v393 = vunpack.c.l.b16 %v361
    %v394 = vunpack.c.l.b16 %v362
    %v395 = vunpack.c.l.b16 %v363
    %v396 = vunpack.c.l.b16 %v364
    %v397 = vunpack.c.l.b16 %v365
    %v398 = vunpack.c.l.b16 %v366
    %v399 = vunpack.c.l.b16 %v367
    %v400 = vpack.c.b16 %v385, %v384
    %v401 = vpack.c.b16 %v387, %v386
    %v402 = vpack.c.b16 %v389, %v388
    %v403 = vpack.c.b16 %v391, %v390
    %v404 = vpack.c.b16 %v393, %v392
    %v405 = vpack.c.b16 %v395, %v394
    %v406 = vpack.c.b16 %v397, %v396
    %v407 = vpack.c.b16 %v399, %v398
    %416 = vmatprep.subr.bf16.mxu0 0
    %417 = vmatpush1.bf16.msra.mxu0 %v407
    %418 = vmatprep.subr.bf16.mxu0 0
    %419 = vmatpush1.bf16.msra.mxu0 %v406
    %420 = vmatprep.subr.bf16.mxu0 0
    %421 = vmatpush1.bf16.msra.mxu0 %v405
    %422 = vmatprep.subr.bf16.mxu0 0
    %423 = vmatpush1.bf16.msra.mxu0 %v404
    %424 = vmatprep.subr.bf16.mxu0 0
    %425 = vmatpush1.bf16.msra.mxu0 %v403
    %426 = vmatprep.subr.bf16.mxu0 0
    %427 = vmatpush1.bf16.msra.mxu0 %v402
    %428 = vmatprep.subr.bf16.mxu0 0
    %429 = vmatpush1.bf16.msra.mxu0 %v401
    %430 = vmatprep.subr.bf16.mxu0 0
    %431 = vmatpush1.bf16.msra.mxu0 %v400
    %432 = vmatprep.subr.bf16.mxu0 0
    %433 = vmatpush2.bf16.msra.mxu0 0
    %434 = vmatprep.subr.bf16.mxu0 0
    %435 = vmatpush2.bf16.msra.mxu0 0
    %436 = vmatprep.subr.bf16.mxu0 0
    %437 = vmatpush2.bf16.msra.mxu0 0
    %438 = vmatprep.subr.bf16.mxu0 0
    %439 = vmatpush2.bf16.msra.mxu0 0
    %440 = vmatprep.subr.bf16.mxu0 0
    %441 = vmatpush2.bf16.msra.mxu0 0
    %442 = vmatprep.subr.bf16.mxu0 0
    %443 = vmatpush2.bf16.msra.mxu0 0
    %444 = vmatprep.subr.bf16.mxu0 0
    %445 = vmatpush2.bf16.msra.mxu0 0
    %446 = vmatprep.subr.bf16.mxu0 0
    %447 = vmatpush2.bf16.msra.mxu0 0
    %448 = vmatprep.mubr.bf16.mxu0 0
    %449 = vmatmul.mubr.bf16.gmra.mxu0 %v351
    %v450 = vpop.f32.mrf.mxu0
    %v451 = vadd.f32 0.0, %v450
    %v452 = vpop.f32.mrf.mxu0
    %v453 = vpop.f32.mrf.mxu0
    %v454 = vadd.f32 0.0, %v453
    %v455 = vpop.f32.mrf.mxu0
    %456 = vdwg.mxu0
    %v457 = vmul.f32 %v451, 0.35355338
    %v458 = vmul.f32 %v454, 0.35355338
    %v459 = vsub.f32 %v457, %v457
    %v460 = vsub.f32 %v458, %v458
    %v461 = vmul.f32 %v459, 1.442695
    %v462 = vpow.pop %v461
    %v463 = vmul.f32 %v460, 1.442695
    %v464 = vpow.pop %v463
    %v465 = vmul.f32 %v462, %v343
    %v466 = vmul.f32 %v464, %v346
    %v467 = vpack.c.bf16 %v466, %v465
    %v468 = vld [vmem:[#allocation8] sm:$0xf]
    %v469 = vld [vmem:[#allocation8 + $0x4] sm:$0xf]
    %v470 = vld [vmem:[#allocation8 + $0x8] sm:$0xf]
    %v471 = vld [vmem:[#allocation8 + $0xc] sm:$0xf]
    %v472 = vld [vmem:[#allocation8 + $0x10] sm:$0xf]
    %v473 = vld [vmem:[#allocation8 + $0x14] sm:$0xf]
    %v474 = vld [vmem:[#allocation8 + $0x18] sm:$0xf]
    %v475 = vld [vmem:[#allocation8 + $0x1c] sm:$0xf]
    %v476 = vld [vmem:[#allocation8 + $0x20] sm:$0xf]
    %v477 = vld [vmem:[#allocation8 + $0x24] sm:$0xf]
    %v478 = vld [vmem:[#allocation8 + $0x28] sm:$0xf]
    %v479 = vld [vmem:[#allocation8 + $0x2c] sm:$0xf]
    %v480 = vld [vmem:[#allocation8 + $0x30] sm:$0xf]
    %v481 = vld [vmem:[#allocation8 + $0x34] sm:$0xf]
    %v482 = vld [vmem:[#allocation8 + $0x38] sm:$0xf]
    %v483 = vld [vmem:[#allocation8 + $0x3c] sm:$0xf]
    %v484 = vld [vmem:[%s5] sm:$0x1]
    %v486 = vlaneseq
    %v487 = vshrl.u32 %v486, 7
    %v488 = vsub.s32 0, %v487
    %v489 = vrot.slane %v484, %v488
    %v507 = vunpack.c.l.b16 %v468
    %v508 = vunpack.c.l.b16 %v469
    %v509 = vunpack.c.l.b16 %v470
    %v510 = vunpack.c.l.b16 %v471
    %v511 = vunpack.c.l.b16 %v472
    %v512 = vunpack.c.l.b16 %v473
    %v513 = vunpack.c.l.b16 %v474
    %v514 = vunpack.c.l.b16 %v475
    %v515 = vunpack.c.l.b16 %v476
    %v516 = vunpack.c.l.b16 %v477
    %v517 = vunpack.c.l.b16 %v478
    %v518 = vunpack.c.l.b16 %v479
    %v519 = vunpack.c.l.b16 %v480
    %v520 = vunpack.c.l.b16 %v481
    %v521 = vunpack.c.l.b16 %v482
    %v522 = vunpack.c.l.b16 %v483
    %v523 = vpack.c.b16 %v508, %v507
    %v524 = vpack.c.b16 %v510, %v509
    %v525 = vpack.c.b16 %v512, %v511
    %v526 = vpack.c.b16 %v514, %v513
    %v527 = vpack.c.b16 %v516, %v515
    %v528 = vpack.c.b16 %v518, %v517
    %v529 = vpack.c.b16 %v520, %v519
    %v530 = vpack.c.b16 %v522, %v521
    %539 = vmatprep.subr.bf16.mxu0 0
    %540 = vmatpush1.bf16.msra.mxu0 %v530
    %541 = vmatprep.subr.bf16.mxu0 0
    %542 = vmatpush1.bf16.msra.mxu0 %v529
    %543 = vmatprep.subr.bf16.mxu0 0
    %544 = vmatpush1.bf16.msra.mxu0 %v528
    %545 = vmatprep.subr.bf16.mxu0 0
    %546 = vmatpush1.bf16.msra.mxu0 %v527
    %547 = vmatprep.subr.bf16.mxu0 0
    %548 = vmatpush1.bf16.msra.mxu0 %v526
    %549 = vmatprep.subr.bf16.mxu0 0
    %550 = vmatpush1.bf16.msra.mxu0 %v525
    %551 = vmatprep.subr.bf16.mxu0 0
    %552 = vmatpush1.bf16.msra.mxu0 %v524
    %553 = vmatprep.subr.bf16.mxu0 0
    %554 = vmatpush1.bf16.msra.mxu0 %v523
    %555 = vmatprep.subr.bf16.mxu0 0
    %556 = vmatpush2.bf16.msra.mxu0 0
    %557 = vmatprep.subr.bf16.mxu0 0
    %558 = vmatpush2.bf16.msra.mxu0 0
    %559 = vmatprep.subr.bf16.mxu0 0
    %560 = vmatpush2.bf16.msra.mxu0 0
    %561 = vmatprep.subr.bf16.mxu0 0
    %562 = vmatpush2.bf16.msra.mxu0 0
    %563 = vmatprep.subr.bf16.mxu0 0
    %564 = vmatpush2.bf16.msra.mxu0 0
    %565 = vmatprep.subr.bf16.mxu0 0
    %566 = vmatpush2.bf16.msra.mxu0 0
    %567 = vmatprep.subr.bf16.mxu0 0
    %568 = vmatpush2.bf16.msra.mxu0 0
    %569 = vmatprep.subr.bf16.mxu0 0
    %570 = vmatpush2.bf16.msra.mxu0 0
    %571 = vmatprep.mubr.bf16.mxu0 0
    %572 = vmatmul.mubr.bf16.gmra.mxu0 %v467
    %v573 = vpop.f32.mrf.mxu0
    %v574 = vadd.f32 %v489, %v573
    %v575 = vpop.f32.mrf.mxu0
    %v576 = vpop.f32.mrf.mxu0
    %v577 = vadd.f32 %v489, %v576
    %v578 = vpop.f32.mrf.mxu0
    %579 = vdwg.mxu0
    %580 = vst [vmem:[#allocation10] sm:$0xff] %v574
    %581 = vst [vmem:[#allocation10 + $0x8] sm:$0xff] %v577
    // Predicated region
    $region42: #{tpu_custom_call.1} parent=1 // pred_check
      _
    $region43: #{tpu_custom_call.1} parent=1 // pred_check_branch
      %583 = sbr.rel (0) target = $region45
    $region44: #{tpu_custom_call.1} parent=1 // pred_region
      %s585 = ssub.s32 256, 256
      %586 = vsyncadd [#allocation4], %s585
      %s587 = sshll.u32 [#allocation10], 4
      %s588 = int_to_ptr.vmem [resolvable:$true] %s587
      %593 = dma.vmem_to_hbm [thread:$0]  %s588, 256, %s6, [#allocation4], 128, 128, 8
    $region45: #{tpu_custom_call.1} parent=1 // pred_fallthru
      _
    // Predicated region
    $region46: #{tpu_custom_call.1} parent=1 // pred_check
      _
    $region47: #{tpu_custom_call.1} parent=1 // pred_check_branch
      %595 = sbr.rel (0) target = $region49
    $region48: #{tpu_custom_call.1} parent=1 // pred_region
      %596 = dma.done [#allocation4], 256
    $region49: #{tpu_custom_call.1} parent=1 // pred_fallthru
      _
    %597 = vsyncpa [#allocation3], 1
    %598 = vsyncpa [#allocation6], 1
    %599 = vsyncpa [#allocation9], 1
    %600 = vsyncpa [#allocation4], 1

</llo_original>
